<compile_context>
chip_gen: v5e
topology: v5e:2x2
jax: 0.10.0
libtpu: 0.0.40
codegen_flags: <defaults>
</compile_context>

<pallas_src>
import functools
import math

import jax
import jax.numpy as jnp
from jax.experimental import pallas as pl
from jax.experimental.pallas import tpu as pltpu

EPS = 1e-12          # config.layer_norm_eps
NEG_INF = -1e30      # stand-in for -inf in masked softmax (underflows to 0 weight)
BF16 = jnp.bfloat16


# ---------------------------------------------------------------------------
# small helpers
# ---------------------------------------------------------------------------
def _layernorm(x, g, b):
    mu = jnp.mean(x, axis=-1, keepdims=True)
    var = jnp.mean((x - mu) ** 2, axis=-1, keepdims=True)
    return (x - mu) * jax.lax.rsqrt(var + EPS) * g + b


def _tile(n, target):
    """Largest divisor of n that is <= target, preferring sublane multiples."""
    if n <= target:
        return n
    for pref in (128, 16, 8, 1):
        for t in range(target, 0, -1):
            if n % t == 0 and t % pref == 0:
                return t
    return n


def _vmem_cap_bytes():
    try:
        return int(pltpu.get_tpu_info().vmem_capacity_bytes)
    except Exception:
        return 64 << 20          # conservative fallback (v7x per-core size)


def _vmem_limit(live_bytes):
    # double-buffered pipeline blocks + in-kernel intermediates, with headroom:
    # never request the full physical capacity.
    cap = _vmem_cap_bytes()
    return int(min(max(live_bytes + (4 << 20), 32 << 20), (cap // 8) * 7))


# ---------------------------------------------------------------------------
# Kernel 1: embedding LayerNorm + padding-mask multiply (flattened row tiles)
# ---------------------------------------------------------------------------
def emb_ln_kernel(x_ref, mcol_ref, vec_ref, o_ref):
    vec = vec_ref[...]                                   # (2, D): gamma, beta
    y = _layernorm(x_ref[...], vec[0:1, :], vec[1:2, :])
    o_ref[...] = (y * mcol_ref[...]).astype(o_ref.dtype)


# ---------------------------------------------------------------------------
# Kernel 2: fused Q/K/V projection (one [D, 3D] matmul), Q pre-scaled
# ---------------------------------------------------------------------------
def qkv_kernel(dmodel, scale, x_ref, w_ref, b_ref, q_ref, k_ref, v_ref):
    y = jnp.dot(x_ref[...], w_ref[...],
                preferred_element_type=jnp.float32) + b_ref[...]   # (TR, 3D) f32
    q_ref[...] = (y[:, :dmodel] * scale).astype(q_ref.dtype)
    k_ref[...] = y[:, dmodel:2 * dmodel].astype(k_ref.dtype)
    v_ref[...] = y[:, 2 * dmodel:].astype(v_ref.dtype)


# ---------------------------------------------------------------------------
# Kernel 3: softmax attention + out-projection + residual + LayerNorm1
# (grid cell = one (batch, query-tile); K/V are the full sequence of the batch)
# ---------------------------------------------------------------------------
def attn_kernel(n_heads, x_ref, q_ref, k_ref, v_ref, mrow_ref,
                wo_ref, vec_ref, o_ref):
    S, D = k_ref.shape
    dph = D // n_heads

    q = q_ref[...]                                  # (TQ, D) bf16, pre-scaled
    k = k_ref[...]                                  # (S, D)  bf16
    v = v_ref[...]                                  # (S, D)  bf16
    neg_mask = (1.0 - mrow_ref[...]) * NEG_INF      # (1, S) additive key mask

    # Per-head attention.  Softmax stays f32; scores/context use bf16 MXU
    # operands with f32 accumulation.
    # TODO(synk): for S >~ 1K, add a key-tile grid axis with online softmax
    # (flash) so the (TQ, S) score tiles stop scaling with S.
    ctx_parts = []
    for h in range(n_heads):
        sl = slice(h * dph, (h + 1) * dph)
        scores = jax.lax.dot_general(               # (TQ, S) f32
            q[:, sl], k[:, sl], (((1,), (1,)), ((), ())),
            preferred_element_type=jnp.float32)
        scores = scores + neg_mask
        scores = scores - jnp.max(scores, axis=-1, keepdims=True)
        e = jnp.exp(scores)
        inv = pl.reciprocal(jnp.sum(e, axis=-1, keepdims=True), approx=True)  # EUP
        w = (e * inv).astype(BF16)
        ctx_parts.append(jnp.dot(w, v[:, sl], preferred_element_type=jnp.float32))

    vec = vec_ref[...]                              # (3, D): bo, g1, be1
    if dph % 128 == 0:
        # lane-aligned heads: assemble a lane-dense (TQ, D) context (pure vreg
        # placement) and run one full-width (K = D) output projection.
        ctx = jnp.concatenate([c.astype(BF16) for c in ctx_parts], axis=-1)
        attn = jnp.dot(ctx, wo_ref[...], preferred_element_type=jnp.float32)
    else:
        # small head dim (e.g. the tiny test shapes): accumulate per-head
        # out-projections -- no unaligned lane concat, no masked narrow stores.
        attn = None
        for h, c in enumerate(ctx_parts):
            part = jnp.dot(c.astype(BF16), wo_ref[h * dph:(h + 1) * dph, :],
                           preferred_element_type=jnp.float32)
            attn = part if attn is None else attn + part

    attn = attn + vec[0:1, :]
    t = x_ref[...].astype(jnp.float32) + attn       # residual in f32
    t = _layernorm(t, vec[1:2, :], vec[2:3, :])
    o_ref[...] = t.astype(o_ref.dtype)


# ---------------------------------------------------------------------------
# Kernel 4: FFN (lin1 + exact gelu + lin2) + residual + LayerNorm2 + pad mask
# ---------------------------------------------------------------------------
def ffn_kernel(t_ref, w1_ref, b1_ref, w2_ref, vec_ref, mcol_ref, o_ref):
    t_b = t_ref[...]                                # (TR, D) bf16
    h1 = jnp.dot(t_b, w1_ref[...],
                 preferred_element_type=jnp.float32) + b1_ref[...]
    h1 = jax.nn.gelu(h1, approximate=False)         # exact erf gelu == F.gelu
    h2 = jnp.dot(h1.astype(BF16), w2_ref[...],
                 preferred_element_type=jnp.float32)
    vec = vec_ref[...]                              # (3, D): b2, g2, be2
    t = t_b.astype(jnp.float32) + (h2 + vec[0:1, :])
    t = _layernorm(t, vec[1:2, :], vec[2:3, :])
    o_ref[...] = (t * mcol_ref[...]).astype(o_ref.dtype)


# ---------------------------------------------------------------------------
# pallas_call wrappers
# ---------------------------------------------------------------------------
def emb_layernorm_mask(x, mcol, emb_vec, tr):
    R, D = x.shape
    live = 2 * (tr * D * 4 + tr * 4 + 2 * D * 4 + tr * D * 2)
    ce = pl.CostEstimate(flops=8 * R * D, transcendentals=R,
                         bytes_accessed=R * D * 4 + R * D * 2 + R * 4 + 2 * D * 4)
    return pl.pallas_call(
        emb_ln_kernel,
        out_shape=jax.ShapeDtypeStruct((R, D), BF16),
        grid=(R // tr,),
        in_specs=[
            pl.BlockSpec((tr, D), lambda i: (i, 0)),
            pl.BlockSpec((tr, 1), lambda i: (i, 0)),
            pl.BlockSpec((2, D), lambda i: (0, 0)),
        ],
        out_specs=pl.BlockSpec((tr, D), lambda i: (i, 0)),
        compiler_params=pltpu.CompilerParams(
            dimension_semantics=("parallel",),
            vmem_limit_bytes=_vmem_limit(live)),
        cost_estimate=ce,
    )(x, mcol, emb_vec)


def qkv_proj(x, wqkv, bqkv, n_heads, tr):
    R, D = x.shape
    scale = 1.0 / math.sqrt(D // n_heads)
    live = (2 * (tr * D * 2 + D * 3 * D * 2 + 3 * D * 4 + 3 * tr * D * 2)
            + tr * 3 * D * 4)
    ce = pl.CostEstimate(
        flops=2 * R * D * 3 * D, transcendentals=0,
        bytes_accessed=R * D * 2 + 3 * R * D * 2 + D * 3 * D * 2 + 3 * D * 4)
    out = jax.ShapeDtypeStruct((R, D), BF16)
    return pl.pallas_call(
        functools.partial(qkv_kernel, D, scale),
        out_shape=(out, out, out),
        grid=(R // tr,),
        in_specs=[
            pl.BlockSpec((tr, D), lambda i: (i, 0)),
            pl.BlockSpec((D, 3 * D), lambda i: (0, 0)),
            pl.BlockSpec((1, 3 * D), lambda i: (0, 0)),
        ],
        out_specs=tuple(pl.BlockSpec((tr, D), lambda i: (i, 0)) for _ in range(3)),
        compiler_params=pltpu.CompilerParams(
            dimension_semantics=("parallel",),
            vmem_limit_bytes=_vmem_limit(live)),
        cost_estimate=ce,
    )(x, wqkv, bqkv)


def attention_block(x, q, k, v, mask_row, wo, attn_vec, n_heads, tq):
    B, S, D = x.shape
    nq = S // tq
    live = (2 * (2 * tq * D * 2 + 2 * S * D * 2 + S * 4 + D * D * 2 + 3 * D * 4
                 + tq * D * 2)
            + 3 * tq * S * 4 + 2 * tq * D * 4)
    ce = pl.CostEstimate(
        flops=B * (4 * S * S * D + 2 * S * D * D),
        transcendentals=B * n_heads * S * S,
        bytes_accessed=4 * B * S * D * 2 + B * S * D * 2 + D * D * 2
                       + 3 * D * 4 + B * S * 4)
    return pl.pallas_call(
        functools.partial(attn_kernel, n_heads),
        out_shape=jax.ShapeDtypeStruct((B, S, D), BF16),
        grid=(B, nq),
        in_specs=[
            pl.BlockSpec((None, tq, D), lambda b, i: (b, i, 0)),   # residual x
            pl.BlockSpec((None, tq, D), lambda b, i: (b, i, 0)),   # q tile
            pl.BlockSpec((None, S, D), lambda b, i: (b, 0, 0)),    # full keys
            pl.BlockSpec((None, S, D), lambda b, i: (b, 0, 0)),    # full values
            pl.BlockSpec((None, 1, S), lambda b, i: (b, 0, 0)),    # key mask
            pl.BlockSpec((D, D), lambda b, i: (0, 0)),             # wo (resident)
            pl.BlockSpec((3, D), lambda b, i: (0, 0)),             # bo, g1, be1
        ],
        out_specs=pl.BlockSpec((None, tq, D), lambda b, i: (b, i, 0)),
        compiler_params=pltpu.CompilerParams(
            dimension_semantics=("parallel", "parallel"),
            vmem_limit_bytes=_vmem_limit(live)),
        cost_estimate=ce,
    )(x, q, k, v, mask_row, wo, attn_vec)


def ffn_block(t, w1, b1, w2, ffn_vec, mcol, tr):
    R, D = t.shape
    H = w1.shape[1]
    live = (2 * (tr * D * 2 + D * H * 2 + H * 4 + H * D * 2 + 3 * D * 4 + tr * 4
                 + tr * D * 2)
            + 2 * tr * H * 4)
    ce = pl.CostEstimate(
        flops=4 * R * D * H,
        transcendentals=R * H,
        bytes_accessed=2 * R * D * 2 + 2 * D * H * 2 + H * 4 + 3 * D * 4 + R * 4)
    return pl.pallas_call(
        ffn_kernel,
        out_shape=jax.ShapeDtypeStruct((R, D), BF16),
        grid=(R // tr,),
        in_specs=[
            pl.BlockSpec((tr, D), lambda i: (i, 0)),
            pl.BlockSpec((D, H), lambda i: (0, 0)),
            pl.BlockSpec((1, H), lambda i: (0, 0)),
            pl.BlockSpec((H, D), lambda i: (0, 0)),
            pl.BlockSpec((3, D), lambda i: (0, 0)),
            pl.BlockSpec((tr, 1), lambda i: (i, 0)),
        ],
        out_specs=pl.BlockSpec((tr, D), lambda i: (i, 0)),
        compiler_params=pltpu.CompilerParams(
            dimension_semantics=("parallel",),
            vmem_limit_bytes=_vmem_limit(live)),
        cost_estimate=ce,
    )(t, w1, b1, w2, ffn_vec, mcol)


# ---------------------------------------------------------------------------
# Full forward
# ---------------------------------------------------------------------------
def xlm_forward(params, input_ids, attention_mask, n_heads, tq=None, tr=None):
    B, S = input_ids.shape
    D = params["emb"].shape[1]
    R = B * S

    if tq is None:
        tq = _tile(S, 256)
        # keep >= 2 attention grid cells so both v7x TensorCores get work
        if B * (S // tq) < 2:
            for cand in (tq // 2, tq // 4):
                if cand >= 8 and cand % 8 == 0 and S % cand == 0:
                    tq = cand
                    break
    if tr is None:
        tr = _tile(R, 512)
    assert S % tq == 0 and R % tr == 0

    mask_f = attention_mask.astype(jnp.float32)
    mask_row = mask_f.reshape(B, 1, S)
    mcol = mask_f.reshape(R, 1)

    # token / position embedding gathers stay in plain JAX (glue)
    x = (params["emb"][input_ids] + params["pos"][:S][None, :, :]).astype(jnp.float32)
    x = emb_layernorm_mask(x.reshape(R, D), mcol, params["emb_vec"], tr)   # bf16

    for lp in params["layers"]:
        q, k, v = qkv_proj(x, lp["wqkv"], lp["bqkv"], n_heads, tr)
        t = attention_block(x.reshape(B, S, D), q.reshape(B, S, D),
                            k.reshape(B, S, D), v.reshape(B, S, D),
                            mask_row, lp["wo"], lp["attn_vec"], n_heads, tq)
        x = ffn_block(t.reshape(R, D), lp["w1"], lp["b1"], lp["w2"],
                      lp["ffn_vec"], mcol, tr)
    return x.reshape(B, S, D).astype(jnp.float32)


# ---------------------------------------------------------------------------
# Deterministic parameter init (synthetic, no checkpoint).  Matmul weights are
# stored in bf16 (MXU-native); biases / LN params / embeddings stay f32.
# Per-layer small vectors are pre-packed into (3, D) blocks.
# ---------------------------------------------------------------------------
def init_params(key, vocab, max_pos, D, n_layers, pad_index):
    H = 4 * D
    keys = jax.random.split(key, 2 + n_layers)

    def lin(k, din, dout):
        k1, k2 = jax.random.split(k)
        w = (jax.random.normal(k1, (din, dout), jnp.float32) * 0.02).astype(BF16)
        b = jax.random.normal(k2, (1, dout), jnp.float32) * 0.02
        return w, b

    emb = jax.random.normal(keys[0], (vocab, D), jnp.float32) * 0.02
    emb = emb.at[pad_index].set(0.0)                    # padding_idx row = 0
    pos = jax.random.normal(keys[1], (max_pos, D), jnp.float32) * 0.02

    ones = jnp.ones((1, D), jnp.float32)
    zeros = jnp.zeros((1, D), jnp.float32)

    layers = []
    for i in range(n_layers):
        lk = jax.random.split(keys[2 + i], 6)
        wq, bq = lin(lk[0], D, D)
        wk, bk = lin(lk[1], D, D)
        wv, bv = lin(lk[2], D, D)
        wo, bo = lin(lk[3], D, D)
        w1, b1 = lin(lk[4], D, H)
        w2, b2 = lin(lk[5], H, D)
        layers.append(dict(
            wqkv=jnp.concatenate([wq, wk, wv], axis=1),            # (D, 3D) bf16
            bqkv=jnp.concatenate([bq, bk, bv], axis=1),            # (1, 3D) f32
            wo=wo,
            attn_vec=jnp.concatenate([bo, ones, zeros], axis=0),   # bo, g1, be1
            w1=w1, b1=b1, w2=w2,
            ffn_vec=jnp.concatenate([b2, ones, zeros], axis=0),    # b2, g2, be2
        ))
    return dict(emb=emb, pos=pos,
                emb_vec=jnp.concatenate([ones, zeros], axis=0),    # g_emb, b_emb
                layers=layers)


# ---------------------------------------------------------------------------
# Pure-JAX reference (mirrors the PyTorch forward, with the same bf16 matmul
# operands and the same bf16 activation boundaries as the kernel path).
# ---------------------------------------------------------------------------
def ref_forward(params, input_ids, attention_mask, n_heads):
    B, S = input_ids.shape
    D = params["emb"].shape[1]
    dph = D // n_heads
    scale = 1.0 / math.sqrt(dph)
    mask_f = attention_mask.astype(jnp.float32)

    def ln(x, g, b):
        mu = jnp.mean(x, -1, keepdims=True)
        var = jnp.mean((x - mu) ** 2, -1, keepdims=True)
        return (x - mu) * jax.lax.rsqrt(var + EPS) * g + b

    def bdot(a, w):
        return jnp.dot(a.astype(BF16), w.astype(BF16),
                       preferred_element_type=jnp.float32)

    x = params["emb"][input_ids] + params["pos"][:S][None]
    x = ln(x, params["emb_vec"][0:1], params["emb_vec"][1:2])
    x = (x * mask_f[..., None]).astype(BF16)                        # boundary

    for lp in params["layers"]:
        y = bdot(x, lp["wqkv"]) + lp["bqkv"]
        q = (y[..., :D] * scale).astype(BF16)
        k = y[..., D:2 * D].astype(BF16)
        v = y[..., 2 * D:].astype(BF16)
        split = lambda t: t.reshape(B, S, n_heads, dph).transpose(0, 2, 1, 3)
        qh, kh, vh = split(q), split(k), split(v)
        scores = jnp.einsum("bhqd,bhkd->bhqk", qh, kh,
                            preferred_element_type=jnp.float32)
        scores = scores + (1.0 - mask_f)[:, None, None, :] * NEG_INF
        scores = scores - jnp.max(scores, -1, keepdims=True)
        e = jnp.exp(scores)
        w = (e / jnp.sum(e, -1, keepdims=True)).astype(BF16)
        ctx = jnp.einsum("bhqk,bhkd->bhqd", w, vh,
                         preferred_element_type=jnp.float32)
        ctx = ctx.transpose(0, 2, 1, 3).reshape(B, S, D).astype(BF16)
        bo, g1, be1 = (lp["attn_vec"][i:i + 1] for i in range(3))
        attn = bdot(ctx, lp["wo"]) + bo
        t = ln(x.astype(jnp.float32) + attn, g1, be1).astype(BF16)  # boundary
        b2, g2, be2 = (lp["ffn_vec"][i:i + 1] for i in range(3))
        h1 = jax.nn.gelu(bdot(t, lp["w1"]) + lp["b1"], approximate=False)
        h2 = bdot(h1, lp["w2"]) + b2
        x = ln(t.astype(jnp.float32) + h2, g2, be2)
        x = (x * mask_f[..., None]).astype(BF16)                    # boundary
    return x.astype(jnp.float32)


if __name__ == "__main__":
    B, S, D, n_heads, n_layers = 2, 8, 32, 4, 2
    vocab, max_pos, pad_index = 50, 16, 1

    key = jax.random.PRNGKey(0)
    kp, kid = jax.random.split(key)
    params = init_params(kp, vocab, max_pos, D, n_layers, pad_index)

    input_ids = jax.random.randint(kid, (B, S), 0, vocab, dtype=jnp.int32)
    input_ids = input_ids.at[1, -2:].set(pad_index)          # some padding
    attention_mask = (input_ids != pad_index).astype(jnp.int32)

    out = xlm_forward(params, input_ids, attention_mask, n_heads)
    out = jax.block_until_ready(out)

    ref = ref_forward(params, input_ids, attention_mask, n_heads)
    assert out.shape == (B, S, D)
    assert bool(jnp.all(jnp.isfinite(out)))
    # tolerance covers the approx EUP reciprocal in the kernel softmax vs. the
    # exact divide in the reference (both paths use bf16 matmul operands and
    # identical bf16 activation boundaries).
    err = float(jnp.max(jnp.abs(out - ref)))
    assert jnp.allclose(out, ref, atol=1e-2, rtol=1e-2), err
    print("KERNEL_OK")
</pallas_src>

<mosaic_0001>
module attributes {stable_mosaic.version = 11 : i64} {
  func.func @emb_ln_kernel(%arg0: i32, %arg1: memref<16x32xf32, #tpu.memory_space<vmem>>, %arg2: memref<16x1xf32, #tpu.memory_space<vmem>>, %arg3: memref<2x32xf32, #tpu.memory_space<vmem>>, %arg4: memref<16x32xbf16, #tpu.memory_space<vmem>>) attributes {dimension_semantics = [#tpu.dimension_semantics<parallel>], iteration_bounds = array<i64: 1>, scalar_prefetch = 0 : i64, scratch_operands = 0 : i64, tpu.core_type = #tpu.core_type<tc>, window_params = [{transform_indices = @transform_0, window_bounds = array<i64: 16, 32>}, {transform_indices = @transform_1, window_bounds = array<i64: 16, 1>}, {pipeline_mode = #tpu.pipeline_mode<synchronous>, transform_indices = @transform_2, window_bounds = array<i64: 2, 32>}, {transform_indices = @transform_3, window_bounds = array<i64: 16, 32>}]} {
    %c0 = arith.constant 0 : index
    %c0_0 = arith.constant 0 : index
    %0 = vector.load %arg3[%c0, %c0_0] : memref<2x32xf32, #tpu.memory_space<vmem>>, vector<2x32xf32>
    %c0_1 = arith.constant 0 : index
    %c0_2 = arith.constant 0 : index
    %1 = vector.load %arg1[%c0_1, %c0_2] : memref<16x32xf32, #tpu.memory_space<vmem>>, vector<16x32xf32>
    %2 = vector.extract_strided_slice %0 {offsets = [0, 0], sizes = [1, 32], strides = [1, 1]} : vector<2x32xf32> to vector<1x32xf32>
    %3 = vector.extract_strided_slice %0 {offsets = [1, 0], sizes = [1, 32], strides = [1, 1]} : vector<2x32xf32> to vector<1x32xf32>
    %cst = arith.constant dense<0.000000e+00> : vector<16xf32>
    %4 = vector.multi_reduction <add>, %1, %cst [1] : vector<16x32xf32> to vector<16xf32>
    %5 = vector.shape_cast %4 : vector<16xf32> to vector<16x1xf32>
    %cst_3 = arith.constant 3.200000e+01 : f32
    %6 = vector.broadcast %cst_3 : f32 to vector<16x1xf32>
    %7 = arith.divf %5, %6 : vector<16x1xf32>
    %8 = vector.broadcast %7 : vector<16x1xf32> to vector<16x32xf32>
    %9 = arith.subf %1, %8 : vector<16x32xf32>
    %10 = arith.mulf %9, %9 : vector<16x32xf32>
    %cst_4 = arith.constant dense<0.000000e+00> : vector<16xf32>
    %11 = vector.multi_reduction <add>, %10, %cst_4 [1] : vector<16x32xf32> to vector<16xf32>
    %12 = vector.shape_cast %11 : vector<16xf32> to vector<16x1xf32>
    %cst_5 = arith.constant 3.200000e+01 : f32
    %13 = vector.broadcast %cst_5 : f32 to vector<16x1xf32>
    %14 = arith.divf %12, %13 : vector<16x1xf32>
    %15 = vector.broadcast %7 : vector<16x1xf32> to vector<16x32xf32>
    %16 = arith.subf %1, %15 : vector<16x32xf32>
    %cst_6 = arith.constant 9.99999996E-13 : f32
    %17 = vector.broadcast %cst_6 : f32 to vector<16x1xf32>
    %18 = arith.addf %14, %17 : vector<16x1xf32>
    %19 = math.rsqrt %18 : vector<16x1xf32>
    %20 = vector.broadcast %19 : vector<16x1xf32> to vector<16x32xf32>
    %21 = arith.mulf %16, %20 : vector<16x32xf32>
    %22 = vector.broadcast %2 : vector<1x32xf32> to vector<16x32xf32>
    %23 = arith.mulf %21, %22 : vector<16x32xf32>
    %24 = vector.broadcast %3 : vector<1x32xf32> to vector<16x32xf32>
    %25 = arith.addf %23, %24 : vector<16x32xf32>
    %c0_7 = arith.constant 0 : index
    %c0_8 = arith.constant 0 : index
    %26 = vector.load %arg2[%c0_7, %c0_8] : memref<16x1xf32, #tpu.memory_space<vmem>>, vector<16x1xf32>
    %27 = vector.broadcast %26 : vector<16x1xf32> to vector<16x32xf32>
    %28 = arith.mulf %25, %27 : vector<16x32xf32>
    %29 = arith.truncf %28 : vector<16x32xf32> to vector<16x32xbf16>
    %c0_9 = arith.constant 0 : index
    %c0_10 = arith.constant 0 : index
    %30 = vector.load %arg4[%c0_9, %c0_10] : memref<16x32xbf16, #tpu.memory_space<vmem>>, vector<16x32xbf16>
    tpu.vector_store %arg4[%c0_9, %c0_10], %29 {strides = array<i32>} : memref<16x32xbf16, #tpu.memory_space<vmem>>, vector<16x32xbf16>,
    return
  }
  func.func @transform_0(%arg0: i32) -> (i32, i32) {
    %c0_i32 = arith.constant 0 : i32
    %c0_i32_0 = arith.constant 0 : i32
    return %arg0, %c0_i32 : i32, i32
  }
  func.func @transform_1(%arg0: i32) -> (i32, i32) {
    %c0_i32 = arith.constant 0 : i32
    %c0_i32_0 = arith.constant 0 : i32
    return %arg0, %c0_i32 : i32, i32
  }
  func.func @transform_2(%arg0: i32) -> (i32, i32) {
    %c0_i32 = arith.constant 0 : i32
    %c0_i32_0 = arith.constant 0 : i32
    %c0_i32_1 = arith.constant 0 : i32
    return %c0_i32, %c0_i32_0 : i32, i32
  }
  func.func @transform_3(%arg0: i32) -> (i32, i32) {
    %c0_i32 = arith.constant 0 : i32
    %c0_i32_0 = arith.constant 0 : i32
    return %arg0, %c0_i32 : i32, i32
  }
}

</mosaic_0001>

<llo_original>
// kernel: tpu_custom_call.1
$region0: #{tpu_custom_call.1}
  #allocation0 [shape = 'u32[]', space=smem, size = 0x4, offset = 0x4, fixed_abs, tag = 'smem constant byte address 0x4 - core index']
  #allocation1 [shape = 'u32[72,128]{1,0:T(1,128)}', space=vmem, size = 0x9000, scoped, tag = 'internal scratch']
  %s0 = inlined_call_operand.vmem [shape: f32[16,32], index: 0, kind: input, shape index: {}]
  %s1 = inlined_call_operand.vmem [shape: f32[16,1], index: 1, kind: input, shape index: {}]
  %s2 = inlined_call_operand.vmem [shape: f32[2,32], index: 2, kind: input, shape index: {}]
  %s3 = inlined_call_operand.hbm [shape: bf16[16,32], index: 3, kind: output, shape index: {}]
  %s4 = sld [smem:[#allocation0]]
  $region22: #{tpu_custom_call.1} parent=0
    _
  %s6 = ssub.s32 1, %s4
  %s7 = scalar_select 0, %s6, %s4
  $region1: #{tpu_custom_call.1} parent=0
    #allocation2 [shape = 'u8[4096]{0}', space=vmem, size = 0x1000, scoped, tag = 'output window, operand 0, single buffered']
    #allocation3 [shape = 's32[1]{0}', space=sflag, size = 0x4, scoped, tag = 'scoped memory for tpu_custom_call.1']
    %8 = vsyncpa [#allocation3], 0
    // Predicated region
    $region2: #{tpu_custom_call.1} parent=1 // pred_check
      _
    $region3: #{tpu_custom_call.1} parent=1 // pred_check_branch
      %10 = sbr.rel (0) target = $region5
    $region4: #{tpu_custom_call.1} parent=1 // pred_region
      _
    $region5: #{tpu_custom_call.1} parent=1 // pred_fallthru
      _
    // Predicated region
    $region6: #{tpu_custom_call.1} parent=1 // pred_check
      _
    $region7: #{tpu_custom_call.1} parent=1 // pred_check_branch
      %12 = sbr.rel (0) target = $region9
    $region8: #{tpu_custom_call.1} parent=1 // pred_region
      _
    $region9: #{tpu_custom_call.1} parent=1 // pred_fallthru
      _
    // Predicated region
    $region10: #{tpu_custom_call.1} parent=1 // pred_check
      _
    $region11: #{tpu_custom_call.1} parent=1 // pred_check_branch
      %14 = sbr.rel (0) target = $region13
    $region12: #{tpu_custom_call.1} parent=1 // pred_region
      _
    $region13: #{tpu_custom_call.1} parent=1 // pred_fallthru
      _
    %v15 = vld [vmem:[%s2] sm:$0x3]
    %v16 = vld [vmem:[%s0] sm:$0xff]
    %v17 = vld [vmem:[%s0 + $0x8] sm:$0xff]
    %vm18 = vcmask 261120
    %v19 = vsel %vm18, %v16, 0.0
    %20 = vadd.xlane.f32.xlu0 %v19
    %v21 = vpop.xlane.xlu0 %20
    %v22 = vsel %vm18, %v17, 0.0
    %23 = vadd.xlane.f32.xlu0 %v22
    %v24 = vpop.xlane.xlu0 %23
    %v25 = vrcp.pop 32.0
    %v26 = vmul.f32 32.0, %v25
    %v27 = vsub.f32 1.0, %v26
    %v28 = vmul.f32 %v25, %v27
    %v29 = vadd.f32 %v25, %v28
    %vm30 = vweird.f32 %v25
    %v31 = vsel %vm30, %v25, %v29
    %v32 = vmul.f32 %v21, %v31
    %v33 = vmul.f32 %v24, %v31
    %v34 = vsub.f32 %v16, %v32
    %v35 = vsub.f32 %v17, %v33
    %v36 = vmul.f32 %v34, %v34
    %v37 = vmul.f32 %v35, %v35
    %v38 = vsel %vm18, %v36, 0.0
    %39 = vadd.xlane.f32.xlu0 %v38
    %v40 = vpop.xlane.xlu0 %39
    %v41 = vsel %vm18, %v37, 0.0
    %42 = vadd.xlane.f32.xlu0 %v41
    %v43 = vpop.xlane.xlu0 %42
    %v44 = vmul.f32 %v40, %v31
    %v45 = vmul.f32 %v43, %v31
    %v46 = vadd.f32 %v44, 1e-12
    %v47 = vadd.f32 %v45, 1e-12
    %v48 = vrsqrt.pop %v46
    %v49 = vmul.f32 %v48, %v46
    %v50 = vmul.f32 %v49, %v48
    %v51 = vmul.f32 0.5, %v50
    %v52 = vsub.f32 1.5, %v51
    %v53 = vmul.f32 %v48, %v52
    %vm54 = vweird.f32 %v46
    %vm55 = vweird.f32 %v48
    %vm56 = vmor %vm54, %vm55
    %v57 = vsel %vm56, %v48, %v53
    %v58 = vrsqrt.pop %v47
    %v59 = vmul.f32 %v58, %v47
    %v60 = vmul.f32 %v59, %v58
    %v61 = vmul.f32 0.5, %v60
    %v62 = vsub.f32 1.5, %v61
    %v63 = vmul.f32 %v58, %v62
    %vm64 = vweird.f32 %v47
    %vm65 = vweird.f32 %v58
    %vm66 = vmor %vm64, %vm65
    %v67 = vsel %vm66, %v58, %v63
    %v68 = vmul.f32 %v34, %v57
    %v69 = vmul.f32 %v35, %v67
    %v70 = vperm.slane %v15, 0
    %v71 = vmul.f32 %v68, %v70
    %v72 = vmul.f32 %v69, %v70
    %v73 = vperm.slane %v15, 1
    %v74 = vadd.f32 %v71, %v73
    %v75 = vadd.f32 %v72, %v73
    %v76 = vld [vmem:[%s1] sm:$0xff]
    %v77 = vld [vmem:[%s1 + $0x8] sm:$0xff]
    %79 = vset.pattern.permute.xlu0 0
    %80 = vperm.xlu0 %79, %v76
    %v81 = vpop.permute.xlu0 %80
    %84 = vset.pattern.permute.xlu0 0
    %85 = vperm.xlu0 %84, %v77
    %v86 = vpop.permute.xlu0 %85
    %v88 = vmul.f32 %v74, %v81
    %v89 = vmul.f32 %v75, %v86
    %v90 = vpack.c.bf16 %v88, %v88
    %v91 = vpack.c.bf16 %v89, %v89
    %vm92 = vcmask 257024
    %93 = vst.msk [vmem:[#allocation2] sm:$0xf] %vm92, %v90
    %94 = vst.msk [vmem:[#allocation2 + $0x4] sm:$0xf] %vm92, %v91
    // Predicated region
    $region14: #{tpu_custom_call.1} parent=1 // pred_check
      _
    $region15: #{tpu_custom_call.1} parent=1 // pred_check_branch
      %96 = sbr.rel (0) target = $region17
    $region16: #{tpu_custom_call.1} parent=1 // pred_region
      %98 = vsyncadd [#allocation3], 0
      %s99 = sshll.u32 [#allocation2], 4
      %s100 = int_to_ptr.vmem [resolvable:$true] %s99
      %s101 = sshll.u32 %s3, 4
      %s102 = int_to_ptr.hbm [resolvable:$true] %s101
      %107 = dma.vmem_to_hbm [thread:$0]  %s100, 128, %s102, [#allocation3], 64, 64, 4
    $region17: #{tpu_custom_call.1} parent=1 // pred_fallthru
      _
    // Predicated region
    $region18: #{tpu_custom_call.1} parent=1 // pred_check
      _
    $region19: #{tpu_custom_call.1} parent=1 // pred_check_branch
      %109 = sbr.rel (0) target = $region21
    $region20: #{tpu_custom_call.1} parent=1 // pred_region
      %111 = dma.done [#allocation3], 128
    $region21: #{tpu_custom_call.1} parent=1 // pred_fallthru
      _
    %112 = vsyncpa [#allocation3], 1

</llo_original>
